<compile_context>
chip_gen: v7x
topology: tpu7x:2x2x1
jax: 0.10.0
libtpu: 0.0.40
codegen_flags: <defaults>
</compile_context>

<pallas_src>
import math
import functools

import jax
import jax.numpy as jnp
from jax.experimental import pallas as pl
from jax.experimental.pallas import tpu as pltpu


def _differ_kernel(amp_idx_ref, emb_ref, sum_ref, w_ref, b_ref, o_ref, *, n_sents):
    # amp_idx_ref: SMEM scalar-prefetch array (used only by the index_maps).
    # emb_ref: (TILE_B, H)  embeddings of sentence i for this batch tile
    # sum_ref: (TILE_B, H)  sum over all sentences for this batch tile (resident)
    # w_ref:   (H, H)       selected amplifier weight, already transposed (x @ w == x @ W.T)
    # b_ref:   (1, H)       selected amplifier bias
    v0 = emb_ref[...]
    s = sum_ref[...]
    inv = 1.0 / float(n_sents - 1)
    # v1 = (s - v0)/(n-1); linear input = v0 - v1 = (n*v0 - s)/(n-1)
    diff = (v0 * float(n_sents) - s) * inv
    y = jnp.dot(diff, w_ref[...], preferred_element_type=jnp.float32)
    o_ref[...] = (y + b_ref[...] + v0).astype(o_ref.dtype)


def _choose_batch_tile(batch):
    if batch % 8 != 0:
        return batch                       # full dim (allowed even if not 8-aligned)
    for t in (256, 128, 64, 32, 16, 8):
        if batch % t == 0:
            return t
    return batch


def differ_layer_forward(sents_embeddings, weights, biases, max_sents_num, mask_cls=None):
    """sents_embeddings: (B, N, H). weights: (max_sents_num, H, H) in PyTorch (out, in) layout.
    biases: (max_sents_num, H). mask_cls is accepted but unused (same as the PyTorch forward)."""
    del mask_cls
    B, N, H = sents_embeddings.shape
    assert N >= 2, "PyTorch forward divides by (sents_num - 1)"
    assert weights.shape == (max_sents_num, H, H) and biases.shape == (max_sents_num, H)

    # Amplifier index per sentence (the PyTorch while-loop is exactly i % max_sents_num).
    amp_idx = (jnp.arange(N) % max_sents_num).astype(jnp.int32)

    # Glue (cheap, one-time): sentence-major layout, per-batch sentence sum, transposed weights.
    emb_t = jnp.swapaxes(sents_embeddings, 0, 1)            # (N, B, H)
    sums = jnp.sum(sents_embeddings, axis=1)                # (B, H)
    w_t = jnp.swapaxes(weights, -1, -2)                     # (max_sents, H_in, H_out)
    b3 = biases.reshape(max_sents_num, 1, H)                # (max_sents, 1, H)

    tile_b = _choose_batch_tile(B)
    nb = B // tile_b

    kernel = functools.partial(_differ_kernel, n_sents=N)

    grid_spec = pltpu.PrefetchScalarGridSpec(
        num_scalar_prefetch=1,
        grid=(N, nb),
        in_specs=[
            # embeddings of sentence i, batch tile b  -> kernel sees (tile_b, H)
            pl.BlockSpec((pl.Squeezed(), tile_b, H), lambda i, b, amp: (i, b, 0)),
            # per-batch-tile sentence sum (constant across i within a batch tile)
            pl.BlockSpec((tile_b, H), lambda i, b, amp: (b, 0)),
            # amplifier weight selected by the prefetched index array
            pl.BlockSpec((pl.Squeezed(), H, H), lambda i, b, amp: (amp[i], 0, 0)),
            # amplifier bias
            pl.BlockSpec((pl.Squeezed(), 1, H), lambda i, b, amp: (amp[i], 0, 0)),
        ],
        out_specs=pl.BlockSpec((pl.Squeezed(), tile_b, H), lambda i, b, amp: (i, b, 0)),
    )

    # Explicit VMEM budget: double-buffered (emb + sums + out) tiles + weight + bias.
    per_buf_bytes = 4 * (3 * tile_b * H + H * H + H)
    vmem_limit = int(min(max(2 * per_buf_bytes + (2 << 20), 16 << 20), 48 << 20))

    out_t = pl.pallas_call(
        kernel,
        out_shape=jax.ShapeDtypeStruct((N, B, H), sents_embeddings.dtype),
        grid_spec=grid_spec,
        compiler_params=pltpu.CompilerParams(
            dimension_semantics=("parallel", "parallel"),
            vmem_limit_bytes=vmem_limit,
        ),
    )(amp_idx, emb_t, sums, w_t, b3)

    return jnp.swapaxes(out_t, 0, 1)                        # (B, N, H)


def _differ_ref(emb, weights, biases, max_sents_num):
    """Pure-JAX reference mirroring the PyTorch forward."""
    B, N, H = emb.shape
    total = jnp.sum(emb, axis=1)
    outs = []
    for i in range(N):
        v0 = emb[:, i, :]
        v1 = (total - v0) / (N - 1)
        a = i % max_sents_num
        res = (v0 - v1) @ weights[a].T + biases[a][None, :] + v0
        outs.append(res)
    return jnp.stack(outs, axis=1)


if __name__ == "__main__":
    # Small deterministic example: batch=8, sents_num=6, hidden=128, max_sents_num=4
    # (sents_num > max_sents_num exercises the amplifier wrap-around path).
    batch, sents_num, hidden, max_sents = 8, 6, 128, 4

    key = jax.random.PRNGKey(0)
    k1, k2, k3 = jax.random.split(key, 3)
    emb = jax.random.normal(k1, (batch, sents_num, hidden), dtype=jnp.float32)
    weights = jax.random.normal(k2, (max_sents, hidden, hidden), dtype=jnp.float32) * (
        1.0 / math.sqrt(hidden))
    biases = jax.random.normal(k3, (max_sents, hidden), dtype=jnp.float32) * 0.02

    out = differ_layer_forward(emb, weights, biases, max_sents)
    out = jax.block_until_ready(out)

    ref = _differ_ref(emb, weights, biases, max_sents)
    assert out.shape == (batch, sents_num, hidden)
    max_err = float(jnp.max(jnp.abs(out - ref)))
    assert jnp.allclose(out, ref, atol=1e-2, rtol=1e-2), f"max abs err {max_err}"

    print("KERNEL_OK")
</pallas_src>

<mosaic_0001>
module attributes {stable_mosaic.version = 11 : i64} {
  func.func @_differ_kernel(%arg0: i32, %arg1: i32, %arg2: memref<6xi32, #tpu.memory_space<smem>>, %arg3: memref<1x8x128xf32, #tpu.memory_space<vmem>>, %arg4: memref<8x128xf32, #tpu.memory_space<vmem>>, %arg5: memref<1x128x128xf32, #tpu.memory_space<vmem>>, %arg6: memref<1x1x128xf32, #tpu.memory_space<vmem>>, %arg7: memref<1x8x128xf32, #tpu.memory_space<vmem>>) attributes {dimension_semantics = [#tpu.dimension_semantics<parallel>, #tpu.dimension_semantics<parallel>], iteration_bounds = array<i64: 6, 1>, scalar_prefetch = 1 : i64, scratch_operands = 0 : i64, tpu.core_type = #tpu.core_type<tc>, window_params = [{transform_indices = @transform_0, window_bounds = array<i64: 1, 8, 128>}, {transform_indices = @transform_1, window_bounds = array<i64: 8, 128>}, {transform_indices = @transform_2, window_bounds = array<i64: 1, 128, 128>}, {transform_indices = @transform_3, window_bounds = array<i64: 1, 1, 128>}, {transform_indices = @transform_4, window_bounds = array<i64: 1, 8, 128>}]} {
    %c0 = arith.constant 0 : index
    %c0_0 = arith.constant 0 : index
    %c0_1 = arith.constant 0 : index
    %0 = vector.load %arg3[%c0, %c0_0, %c0_1] : memref<1x8x128xf32, #tpu.memory_space<vmem>>, vector<1x8x128xf32>
    %1 = vector.shape_cast %0 : vector<1x8x128xf32> to vector<8x128xf32>
    %c0_2 = arith.constant 0 : index
    %c0_3 = arith.constant 0 : index
    %2 = vector.load %arg4[%c0_2, %c0_3] : memref<8x128xf32, #tpu.memory_space<vmem>>, vector<8x128xf32>
    %cst = arith.constant 6.000000e+00 : f32
    %3 = vector.broadcast %cst : f32 to vector<8x128xf32>
    %4 = arith.mulf %1, %3 : vector<8x128xf32>
    %5 = arith.subf %4, %2 : vector<8x128xf32>
    %cst_4 = arith.constant 2.000000e-01 : f32
    %6 = vector.broadcast %cst_4 : f32 to vector<8x128xf32>
    %7 = arith.mulf %5, %6 : vector<8x128xf32>
    %c0_5 = arith.constant 0 : index
    %c0_6 = arith.constant 0 : index
    %c0_7 = arith.constant 0 : index
    %8 = vector.load %arg5[%c0_5, %c0_6, %c0_7] : memref<1x128x128xf32, #tpu.memory_space<vmem>>, vector<1x128x128xf32>
    %9 = vector.shape_cast %8 : vector<1x128x128xf32> to vector<128x128xf32>
    %cst_8 = arith.constant dense<0.000000e+00> : vector<8x128xf32>
    %10 = tpu.matmul %7, %9, %cst_8 {dimension_numbers = #tpu.dot_dimension_numbers<[1], [0], [0], [1], [0, 0, 1, 1], [], []>} : vector<8x128xf32>, vector<128x128xf32>, vector<8x128xf32> -> vector<8x128xf32>
    %c0_9 = arith.constant 0 : index
    %c0_10 = arith.constant 0 : index
    %c0_11 = arith.constant 0 : index
    %11 = vector.load %arg6[%c0_9, %c0_10, %c0_11] : memref<1x1x128xf32, #tpu.memory_space<vmem>>, vector<1x1x128xf32>
    %12 = vector.shape_cast %11 : vector<1x1x128xf32> to vector<1x128xf32>
    %13 = vector.broadcast %12 : vector<1x128xf32> to vector<8x128xf32>
    %14 = arith.addf %10, %13 : vector<8x128xf32>
    %15 = arith.addf %14, %1 : vector<8x128xf32>
    %c0_12 = arith.constant 0 : index
    %c0_13 = arith.constant 0 : index
    %c0_14 = arith.constant 0 : index
    %16 = vector.load %arg7[%c0_12, %c0_13, %c0_14] : memref<1x8x128xf32, #tpu.memory_space<vmem>>, vector<1x8x128xf32>
    %17 = vector.shape_cast %16 : vector<1x8x128xf32> to vector<8x128xf32>
    %18 = vector.shape_cast %15 : vector<8x128xf32> to vector<1x8x128xf32>
    tpu.vector_store %arg7[%c0_12, %c0_13, %c0_14], %18 {strides = array<i32>} : memref<1x8x128xf32, #tpu.memory_space<vmem>>, vector<1x8x128xf32>,
    return
  }
  func.func @transform_0(%arg0: i32, %arg1: i32, %arg2: memref<6xi32, #tpu.memory_space<smem>>) -> (i32, i32, i32) {
    %c0_i32 = arith.constant 0 : i32
    %c0_i32_0 = arith.constant 0 : i32
    return %arg0, %arg1, %c0_i32 : i32, i32, i32
  }
  func.func @transform_1(%arg0: i32, %arg1: i32, %arg2: memref<6xi32, #tpu.memory_space<smem>>) -> (i32, i32) {
    %c0_i32 = arith.constant 0 : i32
    %c0_i32_0 = arith.constant 0 : i32
    return %arg1, %c0_i32 : i32, i32
  }
  func.func @transform_2(%arg0: i32, %arg1: i32, %arg2: memref<6xi32, #tpu.memory_space<smem>>) -> (i32, i32, i32) {
    %0 = arith.index_cast %arg0 : i32 to index
    %1 = memref.load %arg2[%0] : memref<6xi32, #tpu.memory_space<smem>>
    %c0_i32 = arith.constant 0 : i32
    %c0_i32_0 = arith.constant 0 : i32
    %c0_i32_1 = arith.constant 0 : i32
    return %1, %c0_i32, %c0_i32_0 : i32, i32, i32
  }
  func.func @transform_3(%arg0: i32, %arg1: i32, %arg2: memref<6xi32, #tpu.memory_space<smem>>) -> (i32, i32, i32) {
    %0 = arith.index_cast %arg0 : i32 to index
    %1 = memref.load %arg2[%0] : memref<6xi32, #tpu.memory_space<smem>>
    %c0_i32 = arith.constant 0 : i32
    %c0_i32_0 = arith.constant 0 : i32
    %c0_i32_1 = arith.constant 0 : i32
    return %1, %c0_i32, %c0_i32_0 : i32, i32, i32
  }
  func.func @transform_4(%arg0: i32, %arg1: i32, %arg2: memref<6xi32, #tpu.memory_space<smem>>) -> (i32, i32, i32) {
    %c0_i32 = arith.constant 0 : i32
    %c0_i32_0 = arith.constant 0 : i32
    return %arg0, %arg1, %c0_i32 : i32, i32, i32
  }
}

</mosaic_0001>

<llo_original>
// kernel: tpu_custom_call.1
$region0: #{tpu_custom_call.1}
  #allocation0 [shape = 'u32[]', space=smem, size = 0x4, offset = 0x4, fixed_abs, tag = 'smem constant byte address 0x4 - core index']
  #allocation1 [shape = 'u32[144,128]{1,0:T(1,128)}', space=vmem, size = 0x12000, scoped, tag = 'internal scratch']
  #allocation2 [shape = 's32[1]{0}', space=sflag, size = 0x4, scoped, tag = 'scoped memory for tpu_custom_call.1']
  #allocation3 [shape = 'u8[512]{0}', space=smem, size = 0x200, scoped, tag = 'prefetched SMEM operand 0']
  %s0 = inlined_call_operand.hbm [shape: s32[6], index: 0, kind: input, shape index: {}]
  %s1 = inlined_call_operand.hbm [shape: f32[6,8,128], index: 1, kind: input, shape index: {}]
  %s2 = inlined_call_operand.hbm [shape: f32[8,128], index: 2, kind: input, shape index: {}]
  %s3 = inlined_call_operand.hbm [shape: f32[4,128,128], index: 3, kind: input, shape index: {}]
  %s4 = inlined_call_operand.vmem [shape: f32[4,1,128], index: 4, kind: input, shape index: {}]
  %s5 = inlined_call_operand.hbm [shape: f32[6,8,128], index: 5, kind: output, shape index: {}]
  %s6 = sld [smem:[#allocation0]]
  $region61: #{tpu_custom_call.1} parent=0
    _
  %s8 = ssub.s32 1, %s6
  %s9 = scalar_select 0, %s8, %s6
  %11 = dma.hbm_to_smem %s0, 16, [#allocation3], [#allocation2]
  %12 = dma.done [#allocation2], 16
  %13 = sfence
  $region1: #{tpu_custom_call.1} parent=0
    #allocation4 [shape = 'u8[8192]{0}', space=vmem, size = 0x2000, scoped, tag = 'input window, operand 1']
    #allocation5 [shape = 's32[2]{0}', space=sflag, size = 0x8, scoped, tag = 'scoped memory for tpu_custom_call.1']
    #allocation6 [shape = 's32[2]{0}', space=sflag, size = 0x8, scoped, tag = 'scoped memory for tpu_custom_call.1']
    #allocation7 [shape = 'u8[4096]{0}', space=vmem, size = 0x1000, scoped, tag = 'input window, operand 2, single buffered']
    #allocation8 [shape = 's32[1]{0}', space=sflag, size = 0x4, scoped, tag = 'scoped memory for tpu_custom_call.1']
    #allocation9 [shape = 'u8[131072]{0}', space=vmem, size = 0x20000, scoped, tag = 'input window, operand 3']
    #allocation10 [shape = 'u8[8192]{0}', space=vmem, size = 0x2000, scoped, tag = 'output window, operand 0']
    %14 = vsyncpa [#allocation5], 0
    %s15 = scalar_lea.sflag [#allocation5], 1
    %16 = vsyncpa %s15, 0
    %17 = vsyncpa [#allocation8], 0
    %18 = vsyncpa [#allocation6], 0
    %s19 = scalar_lea.sflag [#allocation6], 1
    %20 = vsyncpa %s19, 0
    loop: start=0, step=1, limit=8
    $region2: #{tpu_custom_call.1} parent=1 // loop_pre_header
      _
    $region3: #{tpu_custom_call.1} parent=1 // loop_header
      %s22 = sphi 0, %s26
      %p23 = scmp.ge.s32.totalorder %s22, 8
      %s29 = sphi 0, %s41
      %s30 = sphi 0, %s37
      %s31 = sphi 0, %s29
      %s32 = sphi 0, %s30
      %s33 = sphi 0, %s31
      %s34 = sphi 0, %s32
      %s46 = sphi 0, %s48
      %s49 = sphi 0, %s46
      %s50 = sphi 0, %s49
      %s66 = sphi 0, %s50
      %s72 = sphi 0, %s74
      %s75 = sphi 0, %s72
      %s76 = sphi 0, %s75
      %s92 = sphi 0, %s76
      %s100 = sphi 0, %s102
      %s103 = sphi 0, %s100
      %s104 = sphi 0, %s103
      %s120 = sphi 0, %s104
      %s128 = sphi 0, %s130
      %s131 = sphi 0, %s128
      %s132 = sphi 0, %s131
      %s148 = sphi 0, %s132
      %s156 = sphi 0, %s158
      %s159 = sphi 0, %s156
      %s160 = sphi 0, %s159
      %s176 = sphi 0, %s160
    $region4: #{tpu_custom_call.1} parent=1 // loop_header_branch
      %25 = sbr.rel (%p23) target = $region8
    $region5: #{tpu_custom_call.1} parent=1 // loop_body
      %s27 = ssub.s32 %s22, 1
      %s28 = ssub.s32 %s22, 2
      %s35 = sadd.s32 1, %s30
      %p36 = scmp.ge.s32.totalorder %s35, 1
      %s37 = scalar_select %p36, 0, %s35
      %s38 = sadd.s32 1, %s29
      %s39 = scalar_select %p36, %s38, %s29
      %p40 = scmp.ge.s32.totalorder %s39, 6
      %s41 = scalar_select %p40, 0, %s39
      %s42 = ssub.s32 %s29, %s41
      %s43 = ssub.s32 %s30, %s37
      %s44 = sor.u32 %s42, %s43
      %p45 = scmp.eq.s32.totalorder %s44, 0
      %s47 = sadd.s32 %s46, 1
      %s48 = scalar_select %p45, %s46, %s47
      %p51 = pneg %p45
      %p52 = scmp.eq.s32.totalorder %s22, 5
      %p53 = por %p51, %p52
      %p54 = scmp.ne.s32.totalorder %s46, %s49
      %p55 = scmp.eq.s32.totalorder %s22, 0
      %p56 = por %p54, %p55
      %p57 = scmp.ne.s32.totalorder %s46, %s49
      %p58 = scmp.eq.s32.totalorder %s27, 5
      %p59 = por %p57, %p58
      %p60 = scmp.ne.s32.totalorder %s49, %s50
      %p61 = scmp.eq.s32.totalorder %s27, 0
      %p62 = por %p60, %p61
      %p63 = scmp.ne.s32.totalorder %s49, %s50
      %p64 = scmp.eq.s32.totalorder %s28, 5
      %p65 = por %p63, %p64
      %p67 = scmp.ne.s32.totalorder %s50, %s66
      %p68 = scmp.eq.s32.totalorder %s28, 0
      %p69 = por %p67, %p68
      %s70 = ssub.s32 %s30, %s37
      %p71 = scmp.eq.s32.totalorder %s70, 0
      %s73 = sadd.s32 %s72, 1
      %s74 = scalar_select %p71, %s72, %s73
      %p77 = pneg %p71
      %p78 = scmp.eq.s32.totalorder %s22, 5
      %p79 = por %p77, %p78
      %p80 = scmp.ne.s32.totalorder %s72, %s75
      %p81 = scmp.eq.s32.totalorder %s22, 0
      %p82 = por %p80, %p81
      %p83 = scmp.ne.s32.totalorder %s72, %s75
      %p84 = scmp.eq.s32.totalorder %s27, 5
      %p85 = por %p83, %p84
      %p86 = scmp.ne.s32.totalorder %s75, %s76
      %p87 = scmp.eq.s32.totalorder %s27, 0
      %p88 = por %p86, %p87
      %p89 = scmp.ne.s32.totalorder %s75, %s76
      %p90 = scmp.eq.s32.totalorder %s28, 5
      %p91 = por %p89, %p90
      %p93 = scmp.ne.s32.totalorder %s76, %s92
      %p94 = scmp.eq.s32.totalorder %s28, 0
      %p95 = por %p93, %p94
      %s96 = sld [smem:[#allocation3 + %s29]]
      %s97 = sld [smem:[#allocation3 + %s41]]
      %s98 = ssub.s32 %s96, %s97
      %p99 = scmp.eq.s32.totalorder %s98, 0
      %s101 = sadd.s32 %s100, 1
      %s102 = scalar_select %p99, %s100, %s101
      %p105 = pneg %p99
      %p106 = scmp.eq.s32.totalorder %s22, 5
      %p107 = por %p105, %p106
      %p108 = scmp.ne.s32.totalorder %s100, %s103
      %p109 = scmp.eq.s32.totalorder %s22, 0
      %p110 = por %p108, %p109
      %p111 = scmp.ne.s32.totalorder %s100, %s103
      %p112 = scmp.eq.s32.totalorder %s27, 5
      %p113 = por %p111, %p112
      %p114 = scmp.ne.s32.totalorder %s103, %s104
      %p115 = scmp.eq.s32.totalorder %s27, 0
      %p116 = por %p114, %p115
      %p117 = scmp.ne.s32.totalorder %s103, %s104
      %p118 = scmp.eq.s32.totalorder %s28, 5
      %p119 = por %p117, %p118
      %p121 = scmp.ne.s32.totalorder %s104, %s120
      %p122 = scmp.eq.s32.totalorder %s28, 0
      %p123 = por %p121, %p122
      %s124 = sld [smem:[#allocation3 + %s29]]
      %s125 = sld [smem:[#allocation3 + %s41]]
      %s126 = ssub.s32 %s124, %s125
      %p127 = scmp.eq.s32.totalorder %s126, 0
      %s129 = sadd.s32 %s128, 1
      %s130 = scalar_select %p127, %s128, %s129
      %p133 = pneg %p127
      %p134 = scmp.eq.s32.totalorder %s22, 5
      %p135 = por %p133, %p134
      %p136 = scmp.ne.s32.totalorder %s128, %s131
      %p137 = scmp.eq.s32.totalorder %s22, 0
      %p138 = por %p136, %p137
      %p139 = scmp.ne.s32.totalorder %s128, %s131
      %p140 = scmp.eq.s32.totalorder %s27, 5
      %p141 = por %p139, %p140
      %p142 = scmp.ne.s32.totalorder %s131, %s132
      %p143 = scmp.eq.s32.totalorder %s27, 0
      %p144 = por %p142, %p143
      %p145 = scmp.ne.s32.totalorder %s131, %s132
      %p146 = scmp.eq.s32.totalorder %s28, 5
      %p147 = por %p145, %p146
      %p149 = scmp.ne.s32.totalorder %s132, %s148
      %p150 = scmp.eq.s32.totalorder %s28, 0
      %p151 = por %p149, %p150
      %s152 = ssub.s32 %s29, %s41
      %s153 = ssub.s32 %s30, %s37
      %s154 = sor.u32 %s152, %s153
      %p155 = scmp.eq.s32.totalorder %s154, 0
      %s157 = sadd.s32 %s156, 1
      %s158 = scalar_select %p155, %s156, %s157
      %p161 = pneg %p155
      %p162 = scmp.eq.s32.totalorder %s22, 5
      %p163 = por %p161, %p162
      %p164 = scmp.ne.s32.totalorder %s156, %s159
      %p165 = scmp.eq.s32.totalorder %s22, 0
      %p166 = por %p164, %p165
      %p167 = scmp.ne.s32.totalorder %s156, %s159
      %p168 = scmp.eq.s32.totalorder %s27, 5
      %p169 = por %p167, %p168
      %p170 = scmp.ne.s32.totalorder %s159, %s160
      %p171 = scmp.eq.s32.totalorder %s27, 0
      %p172 = por %p170, %p171
      %p173 = scmp.ne.s32.totalorder %s159, %s160
      %p174 = scmp.eq.s32.totalorder %s28, 5
      %p175 = por %p173, %p174
      %p177 = scmp.ne.s32.totalorder %s160, %s176
      %p178 = scmp.eq.s32.totalorder %s28, 0
      %p179 = por %p177, %p178
      %p180 = scmp.le.s32.totalorder 1, %s22
      %p181 = scmp.lt.s32.totalorder %s22, 7
      %p182 = pnand %p180, %p181
      %p183 = pneg %p182
      // Predicated region
      $region9: #{tpu_custom_call.1} parent=5 // pred_check
        _
      $region10: #{tpu_custom_call.1} parent=5 // pred_check_branch
        %185 = sbr.rel (%p182) target = $region12
      $region11: #{tpu_custom_call.1} parent=5 // pred_region
        %s186 = ssub.s32 %s22, 1
        // Predicated region
        $region13: #{tpu_custom_call.1} parent=11 // pred_check
          %p187 = pneg %p88
        $region14: #{tpu_custom_call.1} parent=11 // pred_check_branch
          %189 = sbr.rel (%p187) target = $region16
        $region15: #{tpu_custom_call.1} parent=11 // pred_region
          %s191 = ssub.s32 128, 128
          %192 = vsyncadd [#allocation8], %s191
          %s193 = smul.addr %s32, 128
          %s194 = scalar_lea.hbm %s2, %s193
          %s196 = sshll.u32 [#allocation7], 4
          %s197 = int_to_ptr.vmem [resolvable:$true] %s196
          %199 = dma.hbm_to_vmem [thread:$0]  %s194, 128, %s197, [#allocation8]
        $region16: #{tpu_custom_call.1} parent=11 // pred_fallthru
          _
      $region12: #{tpu_custom_call.1} parent=5 // pred_fallthru
        _
      %p200 = scmp.lt.s32.totalorder %s22, 6
      // Predicated region
      $region17: #{tpu_custom_call.1} parent=5 // pred_check
        %p201 = pneg %p200
      $region18: #{tpu_custom_call.1} parent=5 // pred_check_branch
        %203 = sbr.rel (%p201) target = $region20
      $region19: #{tpu_custom_call.1} parent=5 // pred_region
        // Predicated region
        $region21: #{tpu_custom_call.1} parent=19 // pred_check
          %p204 = pneg %p56
        $region22: #{tpu_custom_call.1} parent=19 // pred_check_branch
          %206 = sbr.rel (%p204) target = $region24
        $region23: #{tpu_custom_call.1} parent=19 // pred_region
          %s207 = sand.u32 %s22, 1
          %s208 = scalar_lea.sflag [#allocation5], %s207
          %s209 = sand.u32 %s46, 1
          %s210 = smul.addr %s209, 8
          %s211 = scalar_lea.vmem [#allocation4], %s210
          %s213 = ssub.s32 128, 128
          %214 = vsyncadd %s208, %s213
          %s215 = sadd.s32 %s30, %s29
          %s216 = smul.addr %s215, 128
          %s217 = scalar_lea.hbm %s1, %s216
          %s219 = sshll.u32 %s211, 4
          %s220 = int_to_ptr.vmem [resolvable:$true] %s219
          %222 = dma.hbm_to_vmem [thread:$0]  %s217, 128, %s220, %s208
        $region24: #{tpu_custom_call.1} parent=19 // pred_fallthru
          _
        // Predicated region
        $region25: #{tpu_custom_call.1} parent=19 // pred_check
          %p223 = pneg %p110
        $region26: #{tpu_custom_call.1} parent=19 // pred_check_branch
          %225 = sbr.rel (%p223) target = $region28
        $region27: #{tpu_custom_call.1} parent=19 // pred_region
          %s226 = sand.u32 %s22, 1
          %s227 = scalar_lea.sflag [#allocation5], %s226
          %s228 = sand.u32 %s100, 1
          %s229 = smul.addr %s228, 128
          %s230 = scalar_lea.vmem [#allocation9], %s229
          %s231 = sld [smem:[#allocation3 + %s29]]
          %s233 = ssub.s32 2048, 2048
          %234 = vsyncadd %s227, %s233
          %s235 = smul.addr %s231, 16
          %s236 = smul.addr %s235, 128
          %s237 = scalar_lea.hbm %s3, %s236
          %s238 = sshll.u32 %s230, 4
          %s239 = int_to_ptr.vmem [resolvable:$true] %s238
          %244 = dma.hbm_to_vmem [thread:$0]  %s237, 2048, %s239, %s227, 128, 128, 8
        $region28: #{tpu_custom_call.1} parent=19 // pred_fallthru
          _
        // Predicated region
        $region29: #{tpu_custom_call.1} parent=19 // pred_check
          %p245 = pneg %p138
        $region30: #{tpu_custom_call.1} parent=19 // pred_check_branch
          %247 = sbr.rel (%p245) target = $region32
        $region31: #{tpu_custom_call.1} parent=19 // pred_region
          %s248 = sld [smem:[#allocation3 + %s29]]
          %p249 = scmp.lt.s32.totalorder %s248, 3
          %s250 = scalar_select %p249, %s248, 3
          %s251 = scalar_lea.vmem %s4, %s250
          %s252 = sld [smem:[#allocation3 + %s29]]
        $region32: #{tpu_custom_call.1} parent=19 // pred_fallthru
          _
      $region20: #{tpu_custom_call.1} parent=5 // pred_fallthru
        _
      %p253 = scmp.le.s32.totalorder 1, %s22
      %p254 = scmp.lt.s32.totalorder %s22, 7
      %p255 = pnand %p253, %p254
      %p256 = pneg %p255
      // Predicated region
      $region33: #{tpu_custom_call.1} parent=5 // pred_check
        _
      $region34: #{tpu_custom_call.1} parent=5 // pred_check_branch
        %258 = sbr.rel (%p255) target = $region36
      $region35: #{tpu_custom_call.1} parent=5 // pred_region
        %s259 = ssub.s32 %s22, 1
        %s260 = sand.u32 %s27, 1
        %s261 = scalar_lea.sflag [#allocation5], %s260
        %s262 = sand.u32 %s49, 1
        %s263 = smul.addr %s262, 8
        %s264 = scalar_lea.vmem [#allocation4], %s263
        // Predicated region
        $region37: #{tpu_custom_call.1} parent=35 // pred_check
          %p265 = pneg %p62
        $region38: #{tpu_custom_call.1} parent=35 // pred_check_branch
          %267 = sbr.rel (%p265) target = $region40
        $region39: #{tpu_custom_call.1} parent=35 // pred_region
          %268 = dma.done %s261, 128
        $region40: #{tpu_custom_call.1} parent=35 // pred_fallthru
          _
        // Predicated region
        $region41: #{tpu_custom_call.1} parent=35 // pred_check
          %p269 = pneg %p88
        $region42: #{tpu_custom_call.1} parent=35 // pred_check_branch
          %271 = sbr.rel (%p269) target = $region44
        $region43: #{tpu_custom_call.1} parent=35 // pred_region
          %272 = dma.done [#allocation8], 128
        $region44: #{tpu_custom_call.1} parent=35 // pred_fallthru
          _
        %s273 = sand.u32 %s27, 1
        %s274 = scalar_lea.sflag [#allocation5], %s273
        %s275 = sand.u32 %s103, 1
        %s276 = smul.addr %s275, 128
        %s277 = scalar_lea.vmem [#allocation9], %s276
        // Predicated region
        $region45: #{tpu_custom_call.1} parent=35 // pred_check
          %p278 = pneg %p116
        $region46: #{tpu_custom_call.1} parent=35 // pred_check_branch
          %280 = sbr.rel (%p278) target = $region48
        $region47: #{tpu_custom_call.1} parent=35 // pred_region
          %281 = dma.done %s274, 2048
        $region48: #{tpu_custom_call.1} parent=35 // pred_fallthru
          _
        %s282 = sand.u32 %s27, 1
        %s283 = scalar_lea.sflag [#allocation5], %s282
        %s284 = sand.u32 %s49, 1
        %s285 = smul.addr %s284, 8
        %s286 = scalar_lea.vmem [#allocation4], %s285
        %p287 = pneg %p62
        %p288 = pneg %p59
        %p289 = pneg %p88
        %p290 = pneg %p85
        %s291 = sand.u32 %s27, 1
        %s292 = scalar_lea.sflag [#allocation5], %s291
        %s293 = sand.u32 %s103, 1
        %s294 = smul.addr %s293, 128
        %s295 = scalar_lea.vmem [#allocation9], %s294
        %p296 = pneg %p116
        %p297 = pneg %p113
        %s298 = sld [smem:[#allocation3 + %s31]]
        %p299 = scmp.lt.s32.totalorder %s298, 3
        %s300 = scalar_select %p299, %s298, 3
        %s301 = scalar_lea.vmem %s4, %s300
        %p302 = pneg %p144
        %p303 = pneg %p141
        %p304 = pneg %p172
        %p305 = pneg %p169
        %s306 = sand.u32 %s159, 1
        %s307 = scalar_lea.sflag [#allocation6], %s306
        %s308 = sand.u32 %s159, 1
        %s309 = smul.addr %s308, 8
        %s310 = scalar_lea.vmem [#allocation10], %s309
        %s311 = sld [smem:[#allocation3 + %s31]]
        %s312 = sld [smem:[#allocation3 + %s31]]
        %p313 = scmp.lt.s32.totalorder %s312, 3
        %s314 = scalar_select %p313, %s312, 3
        %s315 = scalar_lea.vmem %s4, %s314
        %s316 = sld [smem:[#allocation3 + %s31]]
        %v317 = vld [vmem:[%s264] sm:$0xff]
        %v318 = vld [vmem:[#allocation7] sm:$0xff]
        %v319 = vmul.f32 %v317, 6.0
        %v320 = vsub.f32 %v319, %v318
        %v321 = vmul.f32 %v320, 0.2
        %v322 = vld [vmem:[%s277] sm:$0xff]
        %v323 = vld [vmem:[%s277 + $0x8] sm:$0xff]
        %v324 = vld [vmem:[%s277 + $0x10] sm:$0xff]
        %v325 = vld [vmem:[%s277 + $0x18] sm:$0xff]
        %v326 = vld [vmem:[%s277 + $0x20] sm:$0xff]
        %v327 = vld [vmem:[%s277 + $0x28] sm:$0xff]
        %v328 = vld [vmem:[%s277 + $0x30] sm:$0xff]
        %v329 = vld [vmem:[%s277 + $0x38] sm:$0xff]
        %v330 = vld [vmem:[%s277 + $0x40] sm:$0xff]
        %v331 = vld [vmem:[%s277 + $0x48] sm:$0xff]
        %v332 = vld [vmem:[%s277 + $0x50] sm:$0xff]
        %v333 = vld [vmem:[%s277 + $0x58] sm:$0xff]
        %v334 = vld [vmem:[%s277 + $0x60] sm:$0xff]
        %v335 = vld [vmem:[%s277 + $0x68] sm:$0xff]
        %v336 = vld [vmem:[%s277 + $0x70] sm:$0xff]
        %v337 = vld [vmem:[%s277 + $0x78] sm:$0xff]
        %v338 = vld [vmem:[%s315] sm:$0x1]
        %v340 = vlaneseq
        %v341 = vshrl.u32 %v340, 7
        %v342 = vsub.s32 0, %v341
        %v343 = vrot.slane %v338, %v342
        %345 = vmatprep.subr.mxu0 0.0
        %346 = vmatpush1.msra.mxu0 %v322
        %347 = vmatprep.subr.mxu0 0.0
        %348 = vmatpush1.msra.mxu0 %v323
        %349 = vmatprep.subr.mxu0 0.0
        %350 = vmatpush1.msra.mxu0 %v324
        %351 = vmatprep.subr.mxu0 0.0
        %352 = vmatpush1.msra.mxu0 %v325
        %353 = vmatprep.subr.mxu0 0.0
        %354 = vmatpush1.msra.mxu0 %v326
        %355 = vmatprep.subr.mxu0 0.0
        %356 = vmatpush1.msra.mxu0 %v327
        %357 = vmatprep.subr.mxu0 0.0
        %358 = vmatpush1.msra.mxu0 %v328
        %359 = vmatprep.subr.mxu0 0.0
        %360 = vmatpush1.msra.mxu0 %v329
        %361 = vmatprep.subr.mxu0 0.0
        %362 = vmatpush1.msra.mxu0 %v330
        %363 = vmatprep.subr.mxu0 0.0
        %364 = vmatpush1.msra.mxu0 %v331
        %365 = vmatprep.subr.mxu0 0.0
        %366 = vmatpush1.msra.mxu0 %v332
        %367 = vmatprep.subr.mxu0 0.0
        %368 = vmatpush1.msra.mxu0 %v333
        %369 = vmatprep.subr.mxu0 0.0
        %370 = vmatpush1.msra.mxu0 %v334
        %371 = vmatprep.subr.mxu0 0.0
        %372 = vmatpush1.msra.mxu0 %v335
        %373 = vmatprep.subr.mxu0 0.0
        %374 = vmatpush1.msra.mxu0 %v336
        %375 = vmatprep.subr.mxu0 0.0
        %376 = vmatpush1.msra.mxu0 %v337
        %377 = vmatprep.subr.mxu0 0.0
        %378 = vmatpush1.msra.mxu0 0.0
        %379 = vmatprep.subr.mxu0 0.0
        %380 = vmatpush1.msra.mxu0 0.0
        %381 = vmatprep.subr.mxu0 0.0
        %382 = vmatpush1.msra.mxu0 0.0
        %383 = vmatprep.subr.mxu0 0.0
        %384 = vmatpush1.msra.mxu0 0.0
        %385 = vmatprep.subr.mxu0 0.0
        %386 = vmatpush1.msra.mxu0 0.0
        %387 = vmatprep.subr.mxu0 0.0
        %388 = vmatpush1.msra.mxu0 0.0
        %389 = vmatprep.subr.mxu0 0.0
        %390 = vmatpush1.msra.mxu0 0.0
        %391 = vmatprep.subr.mxu0 0.0
        %392 = vmatpush1.msra.mxu0 0.0
        %393 = vmatprep.subr.mxu0 0.0
        %394 = vmatpush1.msra.mxu0 0.0
        %395 = vmatprep.subr.mxu0 0.0
        %396 = vmatpush1.msra.mxu0 0.0
        %397 = vmatprep.subr.mxu0 0.0
        %398 = vmatpush1.msra.mxu0 0.0
        %399 = vmatprep.subr.mxu0 0.0
        %400 = vmatpush1.msra.mxu0 0.0
        %401 = vmatprep.subr.mxu0 0.0
        %402 = vmatpush1.msra.mxu0 0.0
        %403 = vmatprep.subr.mxu0 0.0
        %404 = vmatpush1.msra.mxu0 0.0
        %405 = vmatprep.subr.mxu0 0.0
        %406 = vmatpush1.msra.mxu0 0.0
        %407 = vmatprep.subr.mxu0 0.0
        %408 = vmatpush1.msra.mxu0 0.0
        %409 = vmatprep.mubr.f32.mxu0 0.0
        %410 = vmatmul.mubr.f32.gmra.mrb[0].mxu0 %v321
        %v411 = vpop.f32.mrb[0].mxu0
        %v412 = vadd.f32 %v343, %v411
        %v413 = vpop.f32.mrb[0].mxu0
        %414 = vdwg.mxu0
        %v415 = vadd.f32 %v412, %v317
        %416 = vst [vmem:[%s310] sm:$0xff] %v415
        %s417 = sand.u32 %s159, 1
        %s418 = scalar_lea.sflag [#allocation6], %s417
        %s419 = sand.u32 %s159, 1
        %s420 = smul.addr %s419, 8
        %s421 = scalar_lea.vmem [#allocation10], %s420
        // Predicated region
        $region49: #{tpu_custom_call.1} parent=35 // pred_check
          %p422 = pneg %p169
        $region50: #{tpu_custom_call.1} parent=35 // pred_check_branch
          %424 = sbr.rel (%p422) target = $region52
        $region51: #{tpu_custom_call.1} parent=35 // pred_region
          %s426 = ssub.s32 128, 128
          %427 = vsyncadd %s418, %s426
          %s428 = sadd.s32 %s32, %s31
          %s429 = smul.addr %s428, 128
          %s430 = scalar_lea.hbm %s5, %s429
          %s432 = sshll.u32 %s421, 4
          %s433 = int_to_ptr.vmem [resolvable:$true] %s432
          %435 = dma.vmem_to_hbm [thread:$0]  %s433, 128, %s430, %s418
        $region52: #{tpu_custom_call.1} parent=35 // pred_fallthru
          _
      $region36: #{tpu_custom_call.1} parent=5 // pred_fallthru
        _
      %p436 = scmp.le.s32.totalorder 2, %s22
      // Predicated region
      $region53: #{tpu_custom_call.1} parent=5 // pred_check
        %p437 = pneg %p436
      $region54: #{tpu_custom_call.1} parent=5 // pred_check_branch
        %439 = sbr.rel (%p437) target = $region56
      $region55: #{tpu_custom_call.1} parent=5 // pred_region
        %s440 = ssub.s32 %s22, 2
        // Predicated region
        $region57: #{tpu_custom_call.1} parent=55 // pred_check
          %p441 = pneg %p175
        $region58: #{tpu_custom_call.1} parent=55 // pred_check_branch
          %443 = sbr.rel (%p441) target = $region60
        $region59: #{tpu_custom_call.1} parent=55 // pred_region
          %s444 = sand.u32 %s160, 1
          %s445 = scalar_lea.sflag [#allocation6], %s444
          %s446 = sand.u32 %s160, 1
          %s447 = smul.addr %s446, 8
          %s448 = scalar_lea.vmem [#allocation10], %s447
          %449 = dma.done %s445, 128
        $region60: #{tpu_custom_call.1} parent=55 // pred_fallthru
          _
      $region56: #{tpu_custom_call.1} parent=5 // pred_fallthru
        _
    $region6: #{tpu_custom_call.1} parent=1 // loop_footer
      %s26 = sadd.s32 1, %s22
    $region7: #{tpu_custom_call.1} parent=1 // loop_footer_branch
      %21 = sbr.rel target = $region3
    $region8: #{tpu_custom_call.1} parent=1 // loop_exit
      _
    %450 = vsyncpa [#allocation5], 1
    %s451 = scalar_lea.sflag [#allocation5], 1
    %452 = vsyncpa %s451, 1
    %453 = vsyncpa [#allocation8], 1
    %454 = vsyncpa [#allocation6], 1
    %s455 = scalar_lea.sflag [#allocation6], 1
    %456 = vsyncpa %s455, 1

</llo_original>
